<compile_context>
chip_gen: v7x
topology: tpu7x:2x2x1
jax: 0.10.0
libtpu: 0.0.40
codegen_flags: <defaults>
</compile_context>

<pallas_src>
import jax
import jax.numpy as jnp
from jax.experimental import pallas as pl
from jax.experimental.pallas import tpu as pltpu

KPAD = 128  # lane-dense contraction width for the fused im2col conv matmul


def _fused_kernel(patch_ref, wconv_ref, pool_ref, wlin_ref, blin_ref, o_ref):
    # conv (+bias, folded into the weight) as one im2col matmul on the MXU.
    acc = jnp.dot(patch_ref[...], wconv_ref[...],
                  preferred_element_type=jnp.float32)          # (B*H*W, Cout)
    acc = jnp.maximum(acc, 0.0)                                # ReLU (VPU)
    # Global average pool as a block-diagonal matmul: (B, M) @ (M, Cout).
    pooled = jnp.dot(pool_ref[...], acc,
                     preferred_element_type=jnp.float32)       # (B, Cout)
    # Linear head.
    out = jnp.dot(pooled, wlin_ref[...],
                  preferred_element_type=jnp.float32) + blin_ref[...]
    o_ref[...] = out.astype(o_ref.dtype)                       # (B, F)


def dog_similarity_classifier_forward(x_nchw, conv_w, conv_b, lin_w, lin_b):
    """x_nchw: (B, Cin, H, W) float32 (PyTorch layout). Returns (B, F) f32."""
    B, Cin, H, W = x_nchw.shape
    Cout = conv_w.shape[-1]
    F = lin_w.shape[-1]
    M = B * H * W
    K = 9 * Cin
    assert K + 1 <= KPAD

    # --- wrapper-side layout plumbing (tiny shapes; all lane-dense) ---------
    x = jnp.transpose(x_nchw, (0, 2, 3, 1))                    # NHWC
    xp = jnp.pad(x, ((0, 0), (1, 1), (1, 1), (0, 0)))          # 'same' halo

    # im2col: (B*H*W, 9*Cin), then pad to KPAD lanes with a constant-1 column
    # at index K so the conv bias folds into the conv matmul.
    cols = [xp[:, kh:kh + H, kw:kw + W, :]
            for kh in range(3) for kw in range(3)]
    patches = jnp.concatenate(cols, axis=-1).reshape(M, K)
    patches = jnp.concatenate(
        [patches,
         jnp.ones((M, 1), jnp.float32),
         jnp.zeros((M, KPAD - K - 1), jnp.float32)], axis=-1)  # (M, 128)

    wconv = jnp.concatenate(
        [conv_w.reshape(K, Cout),                              # taps
         conv_b.reshape(1, Cout),                              # folded bias
         jnp.zeros((KPAD - K - 1, Cout), jnp.float32)], axis=0)  # (128, Cout)

    # Block-diagonal average-pooling matrix: pooled = P @ relu(conv).
    row_batch = jnp.arange(M, dtype=jnp.int32) // (H * W)
    pool = (row_batch[None, :] == jnp.arange(B, dtype=jnp.int32)[:, None])
    pool = pool.astype(jnp.float32) / float(H * W)             # (B, M)

    lin_b2 = lin_b.reshape(1, F)

    # --- single fused Pallas invocation (no grid; whole arrays in VMEM) -----
    return pl.pallas_call(
        _fused_kernel,
        out_shape=jax.ShapeDtypeStruct((B, F), jnp.float32),
        in_specs=[pl.BlockSpec(memory_space=pltpu.MemorySpace.VMEM)] * 5,
        out_specs=pl.BlockSpec(memory_space=pltpu.MemorySpace.VMEM),
    )(patches, wconv, pool, lin_w, lin_b2)


def reference_forward(x_nchw, conv_w, conv_b, lin_w, lin_b):
    """Pure-JAX reference for correctness checking."""
    x = jnp.transpose(x_nchw, (0, 2, 3, 1))                    # NHWC
    y = jax.lax.conv_general_dilated(
        x, conv_w, window_strides=(1, 1), padding="SAME",
        dimension_numbers=("NHWC", "HWIO", "NHWC"))
    y = jnp.maximum(y + conv_b, 0.0)
    pooled = jnp.mean(y, axis=(1, 2))
    return pooled @ lin_w + lin_b


if __name__ == "__main__":
    B, H, W, Cin, Cout, F = 2, 16, 16, 4, 8, 16

    key = jax.random.PRNGKey(0)
    k_x, k_cw, k_cb, k_lw, k_lb = jax.random.split(key, 5)

    x = jax.random.normal(k_x, (B, Cin, H, W), dtype=jnp.float32)
    conv_w = jax.random.normal(k_cw, (3, 3, Cin, Cout), dtype=jnp.float32) * 0.1
    conv_b = jax.random.normal(k_cb, (Cout,), dtype=jnp.float32) * 0.1
    lin_w = jax.random.normal(k_lw, (Cout, F), dtype=jnp.float32) * 0.1
    lin_b = jax.random.normal(k_lb, (F,), dtype=jnp.float32) * 0.1

    out = dog_similarity_classifier_forward(x, conv_w, conv_b, lin_w, lin_b)
    out = jax.block_until_ready(out)

    ref = reference_forward(x, conv_w, conv_b, lin_w, lin_b)
    assert out.shape == (B, F)
    assert jnp.allclose(out, ref, atol=1e-4, rtol=1e-4), "mismatch vs reference"

    print("KERNEL_OK")
</pallas_src>

<mosaic_0001>
module attributes {stable_mosaic.version = 11 : i64} {
  func.func @_fused_kernel(%arg0: memref<512x128xf32, #tpu.memory_space<vmem>>, %arg1: memref<128x8xf32, #tpu.memory_space<vmem>>, %arg2: memref<2x512xf32, #tpu.memory_space<vmem>>, %arg3: memref<8x16xf32, #tpu.memory_space<vmem>>, %arg4: memref<1x16xf32, #tpu.memory_space<vmem>>, %arg5: memref<2x16xf32, #tpu.memory_space<vmem>>) attributes {dimension_semantics = [], scalar_prefetch = 0 : i64, scratch_operands = 0 : i64, tpu.core_type = #tpu.core_type<tc>} {
    %c0 = arith.constant 0 : index
    %c0_0 = arith.constant 0 : index
    %0 = vector.load %arg0[%c0, %c0_0] : memref<512x128xf32, #tpu.memory_space<vmem>>, vector<512x128xf32>
    %c0_1 = arith.constant 0 : index
    %c0_2 = arith.constant 0 : index
    %1 = vector.load %arg1[%c0_1, %c0_2] : memref<128x8xf32, #tpu.memory_space<vmem>>, vector<128x8xf32>
    %cst = arith.constant dense<0.000000e+00> : vector<512x8xf32>
    %2 = tpu.matmul %0, %1, %cst {dimension_numbers = #tpu.dot_dimension_numbers<[1], [0], [0], [1], [0, 0, 1, 1], [], []>} : vector<512x128xf32>, vector<128x8xf32>, vector<512x8xf32> -> vector<512x8xf32>
    %cst_3 = arith.constant 0.000000e+00 : f32
    %3 = vector.broadcast %cst_3 : f32 to vector<512x8xf32>
    %4 = arith.maximumf %2, %3 : vector<512x8xf32>
    %c0_4 = arith.constant 0 : index
    %c0_5 = arith.constant 0 : index
    %5 = vector.load %arg2[%c0_4, %c0_5] : memref<2x512xf32, #tpu.memory_space<vmem>>, vector<2x512xf32>
    %cst_6 = arith.constant dense<0.000000e+00> : vector<2x8xf32>
    %6 = tpu.matmul %5, %4, %cst_6 {dimension_numbers = #tpu.dot_dimension_numbers<[1], [0], [0], [1], [0, 0, 1, 1], [], []>} : vector<2x512xf32>, vector<512x8xf32>, vector<2x8xf32> -> vector<2x8xf32>
    %c0_7 = arith.constant 0 : index
    %c0_8 = arith.constant 0 : index
    %7 = vector.load %arg3[%c0_7, %c0_8] : memref<8x16xf32, #tpu.memory_space<vmem>>, vector<8x16xf32>
    %cst_9 = arith.constant dense<0.000000e+00> : vector<2x16xf32>
    %8 = tpu.matmul %6, %7, %cst_9 {dimension_numbers = #tpu.dot_dimension_numbers<[1], [0], [0], [1], [0, 0, 1, 1], [], []>} : vector<2x8xf32>, vector<8x16xf32>, vector<2x16xf32> -> vector<2x16xf32>
    %c0_10 = arith.constant 0 : index
    %c0_11 = arith.constant 0 : index
    %9 = vector.load %arg4[%c0_10, %c0_11] : memref<1x16xf32, #tpu.memory_space<vmem>>, vector<1x16xf32>
    %10 = vector.broadcast %9 : vector<1x16xf32> to vector<2x16xf32>
    %11 = arith.addf %8, %10 : vector<2x16xf32>
    %c0_12 = arith.constant 0 : index
    %c0_13 = arith.constant 0 : index
    %12 = vector.load %arg5[%c0_12, %c0_13] : memref<2x16xf32, #tpu.memory_space<vmem>>, vector<2x16xf32>
    tpu.vector_store %arg5[%c0_12, %c0_13], %11 {strides = array<i32>} : memref<2x16xf32, #tpu.memory_space<vmem>>, vector<2x16xf32>,
    return
  }
}

</mosaic_0001>

<llo_original>
// kernel: tpu_custom_call.1
$region0: #{tpu_custom_call.1}
  #allocation0 [shape = 'u32[]', space=smem, size = 0x4, offset = 0x4, fixed_abs, tag = 'smem constant byte address 0x4 - core index']
  #allocation1 [shape = 'u32[144,128]{1,0:T(1,128)}', space=vmem, size = 0x12000, scoped, tag = 'internal scratch']
  %s0 = inlined_call_operand.hbm [shape: f32[512,128], index: 0, kind: input, shape index: {}]
  %s1 = inlined_call_operand.vmem [shape: f32[128,8], index: 1, kind: input, shape index: {}]
  %s2 = inlined_call_operand.vmem [shape: f32[2,512], index: 2, kind: input, shape index: {}]
  %s3 = inlined_call_operand.vmem [shape: f32[8,16], index: 3, kind: input, shape index: {}]
  %s4 = inlined_call_operand.vmem [shape: f32[1,16], index: 4, kind: input, shape index: {}]
  %s5 = inlined_call_operand.hbm [shape: f32[2,16], index: 5, kind: output, shape index: {}]
  %s6 = sld [smem:[#allocation0]]
  $region34: #{tpu_custom_call.1} parent=0
    _
  %s8 = ssub.s32 1, %s6
  %s9 = scalar_select 0, %s8, %s6
  $region1: #{tpu_custom_call.1} parent=0
    #allocation2 [shape = 'u8[262144]{0}', space=vmem, size = 0x40000, scoped, tag = 'input window, operand 0, single buffered']
    #allocation3 [shape = 's32[1]{0}', space=sflag, size = 0x4, scoped, tag = 'scoped memory for tpu_custom_call.1']
    #allocation4 [shape = 's32[1]{0}', space=sflag, size = 0x4, scoped, tag = 'scoped memory for tpu_custom_call.1']
    #allocation5 [shape = 'u8[1024]{0}', space=vmem, size = 0x400, scoped, tag = 'output window, operand 0, single buffered']
    %10 = vsyncpa [#allocation3], 0
    %11 = vsyncpa [#allocation4], 0
    // Predicated region
    $region2: #{tpu_custom_call.1} parent=1 // pred_check
      _
    $region3: #{tpu_custom_call.1} parent=1 // pred_check_branch
      %13 = sbr.rel (0) target = $region5
    $region4: #{tpu_custom_call.1} parent=1 // pred_region
      %s15 = ssub.s32 8192, 8192
      %16 = vsyncadd [#allocation3], %s15
      %s17 = sshll.u32 [#allocation2], 4
      %s18 = int_to_ptr.vmem [resolvable:$true] %s17
      %23 = dma.hbm_to_vmem [thread:$0]  %s0, 8192, %s18, [#allocation3], 128, 128, 8
    $region5: #{tpu_custom_call.1} parent=1 // pred_fallthru
      _
    // Predicated region
    $region6: #{tpu_custom_call.1} parent=1 // pred_check
      _
    $region7: #{tpu_custom_call.1} parent=1 // pred_check_branch
      %25 = sbr.rel (0) target = $region9
    $region8: #{tpu_custom_call.1} parent=1 // pred_region
      _
    $region9: #{tpu_custom_call.1} parent=1 // pred_fallthru
      _
    // Predicated region
    $region10: #{tpu_custom_call.1} parent=1 // pred_check
      _
    $region11: #{tpu_custom_call.1} parent=1 // pred_check_branch
      %27 = sbr.rel (0) target = $region13
    $region12: #{tpu_custom_call.1} parent=1 // pred_region
      _
    $region13: #{tpu_custom_call.1} parent=1 // pred_fallthru
      _
    // Predicated region
    $region14: #{tpu_custom_call.1} parent=1 // pred_check
      _
    $region15: #{tpu_custom_call.1} parent=1 // pred_check_branch
      %29 = sbr.rel (0) target = $region17
    $region16: #{tpu_custom_call.1} parent=1 // pred_region
      _
    $region17: #{tpu_custom_call.1} parent=1 // pred_fallthru
      _
    // Predicated region
    $region18: #{tpu_custom_call.1} parent=1 // pred_check
      _
    $region19: #{tpu_custom_call.1} parent=1 // pred_check_branch
      %31 = sbr.rel (0) target = $region21
    $region20: #{tpu_custom_call.1} parent=1 // pred_region
      _
    $region21: #{tpu_custom_call.1} parent=1 // pred_fallthru
      _
    // Predicated region
    $region22: #{tpu_custom_call.1} parent=1 // pred_check
      _
    $region23: #{tpu_custom_call.1} parent=1 // pred_check_branch
      %33 = sbr.rel (0) target = $region25
    $region24: #{tpu_custom_call.1} parent=1 // pred_region
      %34 = dma.done [#allocation3], 8192
    $region25: #{tpu_custom_call.1} parent=1 // pred_fallthru
      _
    %v35 = vld [vmem:[#allocation2] sm:$0xff]
    %v36 = vld [vmem:[#allocation2 + $0x8] sm:$0xff]
    %v37 = vld [vmem:[#allocation2 + $0x10] sm:$0xff]
    %v38 = vld [vmem:[#allocation2 + $0x18] sm:$0xff]
    %v39 = vld [vmem:[#allocation2 + $0x20] sm:$0xff]
    %v40 = vld [vmem:[#allocation2 + $0x28] sm:$0xff]
    %v41 = vld [vmem:[#allocation2 + $0x30] sm:$0xff]
    %v42 = vld [vmem:[#allocation2 + $0x38] sm:$0xff]
    %v43 = vld [vmem:[#allocation2 + $0x40] sm:$0xff]
    %v44 = vld [vmem:[#allocation2 + $0x48] sm:$0xff]
    %v45 = vld [vmem:[#allocation2 + $0x50] sm:$0xff]
    %v46 = vld [vmem:[#allocation2 + $0x58] sm:$0xff]
    %v47 = vld [vmem:[#allocation2 + $0x60] sm:$0xff]
    %v48 = vld [vmem:[#allocation2 + $0x68] sm:$0xff]
    %v49 = vld [vmem:[#allocation2 + $0x70] sm:$0xff]
    %v50 = vld [vmem:[#allocation2 + $0x78] sm:$0xff]
    %v51 = vld [vmem:[#allocation2 + $0x80] sm:$0xff]
    %v52 = vld [vmem:[#allocation2 + $0x88] sm:$0xff]
    %v53 = vld [vmem:[#allocation2 + $0x90] sm:$0xff]
    %v54 = vld [vmem:[#allocation2 + $0x98] sm:$0xff]
    %v55 = vld [vmem:[#allocation2 + $0xa0] sm:$0xff]
    %v56 = vld [vmem:[#allocation2 + $0xa8] sm:$0xff]
    %v57 = vld [vmem:[#allocation2 + $0xb0] sm:$0xff]
    %v58 = vld [vmem:[#allocation2 + $0xb8] sm:$0xff]
    %v59 = vld [vmem:[#allocation2 + $0xc0] sm:$0xff]
    %v60 = vld [vmem:[#allocation2 + $0xc8] sm:$0xff]
    %v61 = vld [vmem:[#allocation2 + $0xd0] sm:$0xff]
    %v62 = vld [vmem:[#allocation2 + $0xd8] sm:$0xff]
    %v63 = vld [vmem:[#allocation2 + $0xe0] sm:$0xff]
    %v64 = vld [vmem:[#allocation2 + $0xe8] sm:$0xff]
    %v65 = vld [vmem:[#allocation2 + $0xf0] sm:$0xff]
    %v66 = vld [vmem:[#allocation2 + $0xf8] sm:$0xff]
    %v67 = vld [vmem:[#allocation2 + $0x100] sm:$0xff]
    %v68 = vld [vmem:[#allocation2 + $0x108] sm:$0xff]
    %v69 = vld [vmem:[#allocation2 + $0x110] sm:$0xff]
    %v70 = vld [vmem:[#allocation2 + $0x118] sm:$0xff]
    %v71 = vld [vmem:[#allocation2 + $0x120] sm:$0xff]
    %v72 = vld [vmem:[#allocation2 + $0x128] sm:$0xff]
    %v73 = vld [vmem:[#allocation2 + $0x130] sm:$0xff]
    %v74 = vld [vmem:[#allocation2 + $0x138] sm:$0xff]
    %v75 = vld [vmem:[#allocation2 + $0x140] sm:$0xff]
    %v76 = vld [vmem:[#allocation2 + $0x148] sm:$0xff]
    %v77 = vld [vmem:[#allocation2 + $0x150] sm:$0xff]
    %v78 = vld [vmem:[#allocation2 + $0x158] sm:$0xff]
    %v79 = vld [vmem:[#allocation2 + $0x160] sm:$0xff]
    %v80 = vld [vmem:[#allocation2 + $0x168] sm:$0xff]
    %v81 = vld [vmem:[#allocation2 + $0x170] sm:$0xff]
    %v82 = vld [vmem:[#allocation2 + $0x178] sm:$0xff]
    %v83 = vld [vmem:[#allocation2 + $0x180] sm:$0xff]
    %v84 = vld [vmem:[#allocation2 + $0x188] sm:$0xff]
    %v85 = vld [vmem:[#allocation2 + $0x190] sm:$0xff]
    %v86 = vld [vmem:[#allocation2 + $0x198] sm:$0xff]
    %v87 = vld [vmem:[#allocation2 + $0x1a0] sm:$0xff]
    %v88 = vld [vmem:[#allocation2 + $0x1a8] sm:$0xff]
    %v89 = vld [vmem:[#allocation2 + $0x1b0] sm:$0xff]
    %v90 = vld [vmem:[#allocation2 + $0x1b8] sm:$0xff]
    %v91 = vld [vmem:[#allocation2 + $0x1c0] sm:$0xff]
    %v92 = vld [vmem:[#allocation2 + $0x1c8] sm:$0xff]
    %v93 = vld [vmem:[#allocation2 + $0x1d0] sm:$0xff]
    %v94 = vld [vmem:[#allocation2 + $0x1d8] sm:$0xff]
    %v95 = vld [vmem:[#allocation2 + $0x1e0] sm:$0xff]
    %v96 = vld [vmem:[#allocation2 + $0x1e8] sm:$0xff]
    %v97 = vld [vmem:[#allocation2 + $0x1f0] sm:$0xff]
    %v98 = vld [vmem:[#allocation2 + $0x1f8] sm:$0xff]
    %v99 = vld [vmem:[%s1] sm:$0xff]
    %v100 = vld [vmem:[%s1 + $0x8] sm:$0xff]
    %v101 = vld [vmem:[%s1 + $0x10] sm:$0xff]
    %v102 = vld [vmem:[%s1 + $0x18] sm:$0xff]
    %v103 = vld [vmem:[%s1 + $0x20] sm:$0xff]
    %v104 = vld [vmem:[%s1 + $0x28] sm:$0xff]
    %v105 = vld [vmem:[%s1 + $0x30] sm:$0xff]
    %v106 = vld [vmem:[%s1 + $0x38] sm:$0xff]
    %v107 = vld [vmem:[%s1 + $0x40] sm:$0xff]
    %v108 = vld [vmem:[%s1 + $0x48] sm:$0xff]
    %v109 = vld [vmem:[%s1 + $0x50] sm:$0xff]
    %v110 = vld [vmem:[%s1 + $0x58] sm:$0xff]
    %v111 = vld [vmem:[%s1 + $0x60] sm:$0xff]
    %v112 = vld [vmem:[%s1 + $0x68] sm:$0xff]
    %v113 = vld [vmem:[%s1 + $0x70] sm:$0xff]
    %v114 = vld [vmem:[%s1 + $0x78] sm:$0xff]
    %115 = vmatprep.subr.mxu0 0.0
    %116 = vmatpush1.msra.mxu0 %v99
    %117 = vmatprep.subr.mxu0 0.0
    %118 = vmatpush1.msra.mxu0 %v100
    %119 = vmatprep.subr.mxu0 0.0
    %120 = vmatpush1.msra.mxu0 %v101
    %121 = vmatprep.subr.mxu0 0.0
    %122 = vmatpush1.msra.mxu0 %v102
    %123 = vmatprep.subr.mxu0 0.0
    %124 = vmatpush1.msra.mxu0 %v103
    %125 = vmatprep.subr.mxu0 0.0
    %126 = vmatpush1.msra.mxu0 %v104
    %127 = vmatprep.subr.mxu0 0.0
    %128 = vmatpush1.msra.mxu0 %v105
    %129 = vmatprep.subr.mxu0 0.0
    %130 = vmatpush1.msra.mxu0 %v106
    %131 = vmatprep.subr.mxu0 0.0
    %132 = vmatpush1.msra.mxu0 %v107
    %133 = vmatprep.subr.mxu0 0.0
    %134 = vmatpush1.msra.mxu0 %v108
    %135 = vmatprep.subr.mxu0 0.0
    %136 = vmatpush1.msra.mxu0 %v109
    %137 = vmatprep.subr.mxu0 0.0
    %138 = vmatpush1.msra.mxu0 %v110
    %139 = vmatprep.subr.mxu0 0.0
    %140 = vmatpush1.msra.mxu0 %v111
    %141 = vmatprep.subr.mxu0 0.0
    %142 = vmatpush1.msra.mxu0 %v112
    %143 = vmatprep.subr.mxu0 0.0
    %144 = vmatpush1.msra.mxu0 %v113
    %145 = vmatprep.subr.mxu0 0.0
    %146 = vmatpush1.msra.mxu0 %v114
    %147 = vmatprep.subr.mxu0 0.0
    %148 = vmatpush1.msra.mxu0 0.0
    %149 = vmatprep.subr.mxu0 0.0
    %150 = vmatpush1.msra.mxu0 0.0
    %151 = vmatprep.subr.mxu0 0.0
    %152 = vmatpush1.msra.mxu0 0.0
    %153 = vmatprep.subr.mxu0 0.0
    %154 = vmatpush1.msra.mxu0 0.0
    %155 = vmatprep.subr.mxu0 0.0
    %156 = vmatpush1.msra.mxu0 0.0
    %157 = vmatprep.subr.mxu0 0.0
    %158 = vmatpush1.msra.mxu0 0.0
    %159 = vmatprep.subr.mxu0 0.0
    %160 = vmatpush1.msra.mxu0 0.0
    %161 = vmatprep.subr.mxu0 0.0
    %162 = vmatpush1.msra.mxu0 0.0
    %163 = vmatprep.subr.mxu0 0.0
    %164 = vmatpush1.msra.mxu0 0.0
    %165 = vmatprep.subr.mxu0 0.0
    %166 = vmatpush1.msra.mxu0 0.0
    %167 = vmatprep.subr.mxu0 0.0
    %168 = vmatpush1.msra.mxu0 0.0
    %169 = vmatprep.subr.mxu0 0.0
    %170 = vmatpush1.msra.mxu0 0.0
    %171 = vmatprep.subr.mxu0 0.0
    %172 = vmatpush1.msra.mxu0 0.0
    %173 = vmatprep.subr.mxu0 0.0
    %174 = vmatpush1.msra.mxu0 0.0
    %175 = vmatprep.subr.mxu0 0.0
    %176 = vmatpush1.msra.mxu0 0.0
    %177 = vmatprep.subr.mxu0 0.0
    %178 = vmatpush1.msra.mxu0 0.0
    %179 = vmatprep.mubr.f32.mxu0 0.0
    %180 = vmatmul.mubr.f32.gmra.mrb[0].mxu0 %v35
    %v181 = vpop.f32.mrb[0].mxu0
    %v182 = vadd.f32 0.0, %v181
    %v183 = vpop.f32.mrb[0].mxu0
    %184 = vmatprep.mubr.f32.mxu0 0.0
    %185 = vmatmul.mubr.f32.gmra.mrb[0].mxu0 %v36
    %v186 = vpop.f32.mrb[0].mxu0
    %v187 = vadd.f32 0.0, %v186
    %v188 = vpop.f32.mrb[0].mxu0
    %189 = vmatprep.mubr.f32.mxu0 0.0
    %190 = vmatmul.mubr.f32.gmra.mrb[0].mxu0 %v37
    %v191 = vpop.f32.mrb[0].mxu0
    %v192 = vadd.f32 0.0, %v191
    %v193 = vpop.f32.mrb[0].mxu0
    %194 = vmatprep.mubr.f32.mxu0 0.0
    %195 = vmatmul.mubr.f32.gmra.mrb[0].mxu0 %v38
    %v196 = vpop.f32.mrb[0].mxu0
    %v197 = vadd.f32 0.0, %v196
    %v198 = vpop.f32.mrb[0].mxu0
    %199 = vmatprep.mubr.f32.mxu0 0.0
    %200 = vmatmul.mubr.f32.gmra.mrb[0].mxu0 %v39
    %v201 = vpop.f32.mrb[0].mxu0
    %v202 = vadd.f32 0.0, %v201
    %v203 = vpop.f32.mrb[0].mxu0
    %204 = vmatprep.mubr.f32.mxu0 0.0
    %205 = vmatmul.mubr.f32.gmra.mrb[0].mxu0 %v40
    %v206 = vpop.f32.mrb[0].mxu0
    %v207 = vadd.f32 0.0, %v206
    %v208 = vpop.f32.mrb[0].mxu0
    %209 = vmatprep.mubr.f32.mxu0 0.0
    %210 = vmatmul.mubr.f32.gmra.mrb[0].mxu0 %v41
    %v211 = vpop.f32.mrb[0].mxu0
    %v212 = vadd.f32 0.0, %v211
    %v213 = vpop.f32.mrb[0].mxu0
    %214 = vmatprep.mubr.f32.mxu0 0.0
    %215 = vmatmul.mubr.f32.gmra.mrb[0].mxu0 %v42
    %v216 = vpop.f32.mrb[0].mxu0
    %v217 = vadd.f32 0.0, %v216
    %v218 = vpop.f32.mrb[0].mxu0
    %219 = vmatprep.mubr.f32.mxu0 0.0
    %220 = vmatmul.mubr.f32.gmra.mrb[0].mxu0 %v43
    %v221 = vpop.f32.mrb[0].mxu0
    %v222 = vadd.f32 0.0, %v221
    %v223 = vpop.f32.mrb[0].mxu0
    %224 = vmatprep.mubr.f32.mxu0 0.0
    %225 = vmatmul.mubr.f32.gmra.mrb[0].mxu0 %v44
    %v226 = vpop.f32.mrb[0].mxu0
    %v227 = vadd.f32 0.0, %v226
    %v228 = vpop.f32.mrb[0].mxu0
    %229 = vmatprep.mubr.f32.mxu0 0.0
    %230 = vmatmul.mubr.f32.gmra.mrb[0].mxu0 %v45
    %v231 = vpop.f32.mrb[0].mxu0
    %v232 = vadd.f32 0.0, %v231
    %v233 = vpop.f32.mrb[0].mxu0
    %234 = vmatprep.mubr.f32.mxu0 0.0
    %235 = vmatmul.mubr.f32.gmra.mrb[0].mxu0 %v46
    %v236 = vpop.f32.mrb[0].mxu0
    %v237 = vadd.f32 0.0, %v236
    %v238 = vpop.f32.mrb[0].mxu0
    %239 = vmatprep.mubr.f32.mxu0 0.0
    %240 = vmatmul.mubr.f32.gmra.mrb[0].mxu0 %v47
    %v241 = vpop.f32.mrb[0].mxu0
    %v242 = vadd.f32 0.0, %v241
    %v243 = vpop.f32.mrb[0].mxu0
    %244 = vmatprep.mubr.f32.mxu0 0.0
    %245 = vmatmul.mubr.f32.gmra.mrb[0].mxu0 %v48
    %v246 = vpop.f32.mrb[0].mxu0
    %v247 = vadd.f32 0.0, %v246
    %v248 = vpop.f32.mrb[0].mxu0
    %249 = vmatprep.mubr.f32.mxu0 0.0
    %250 = vmatmul.mubr.f32.gmra.mrb[0].mxu0 %v49
    %v251 = vpop.f32.mrb[0].mxu0
    %v252 = vadd.f32 0.0, %v251
    %v253 = vpop.f32.mrb[0].mxu0
    %254 = vmatprep.mubr.f32.mxu0 0.0
    %255 = vmatmul.mubr.f32.gmra.mrb[0].mxu0 %v50
    %v256 = vpop.f32.mrb[0].mxu0
    %v257 = vadd.f32 0.0, %v256
    %v258 = vpop.f32.mrb[0].mxu0
    %259 = vmatprep.mubr.f32.mxu0 0.0
    %260 = vmatmul.mubr.f32.gmra.mrb[0].mxu0 %v51
    %v261 = vpop.f32.mrb[0].mxu0
    %v262 = vadd.f32 0.0, %v261
    %v263 = vpop.f32.mrb[0].mxu0
    %264 = vmatprep.mubr.f32.mxu0 0.0
    %265 = vmatmul.mubr.f32.gmra.mrb[0].mxu0 %v52
    %v266 = vpop.f32.mrb[0].mxu0
    %v267 = vadd.f32 0.0, %v266
    %v268 = vpop.f32.mrb[0].mxu0
    %269 = vmatprep.mubr.f32.mxu0 0.0
    %270 = vmatmul.mubr.f32.gmra.mrb[0].mxu0 %v53
    %v271 = vpop.f32.mrb[0].mxu0
    %v272 = vadd.f32 0.0, %v271
    %v273 = vpop.f32.mrb[0].mxu0
    %274 = vmatprep.mubr.f32.mxu0 0.0
    %275 = vmatmul.mubr.f32.gmra.mrb[0].mxu0 %v54
    %v276 = vpop.f32.mrb[0].mxu0
    %v277 = vadd.f32 0.0, %v276
    %v278 = vpop.f32.mrb[0].mxu0
    %279 = vmatprep.mubr.f32.mxu0 0.0
    %280 = vmatmul.mubr.f32.gmra.mrb[0].mxu0 %v55
    %v281 = vpop.f32.mrb[0].mxu0
    %v282 = vadd.f32 0.0, %v281
    %v283 = vpop.f32.mrb[0].mxu0
    %284 = vmatprep.mubr.f32.mxu0 0.0
    %285 = vmatmul.mubr.f32.gmra.mrb[0].mxu0 %v56
    %v286 = vpop.f32.mrb[0].mxu0
    %v287 = vadd.f32 0.0, %v286
    %v288 = vpop.f32.mrb[0].mxu0
    %289 = vmatprep.mubr.f32.mxu0 0.0
    %290 = vmatmul.mubr.f32.gmra.mrb[0].mxu0 %v57
    %v291 = vpop.f32.mrb[0].mxu0
    %v292 = vadd.f32 0.0, %v291
    %v293 = vpop.f32.mrb[0].mxu0
    %294 = vmatprep.mubr.f32.mxu0 0.0
    %295 = vmatmul.mubr.f32.gmra.mrb[0].mxu0 %v58
    %v296 = vpop.f32.mrb[0].mxu0
    %v297 = vadd.f32 0.0, %v296
    %v298 = vpop.f32.mrb[0].mxu0
    %299 = vmatprep.mubr.f32.mxu0 0.0
    %300 = vmatmul.mubr.f32.gmra.mrb[0].mxu0 %v59
    %v301 = vpop.f32.mrb[0].mxu0
    %v302 = vadd.f32 0.0, %v301
    %v303 = vpop.f32.mrb[0].mxu0
    %304 = vmatprep.mubr.f32.mxu0 0.0
    %305 = vmatmul.mubr.f32.gmra.mrb[0].mxu0 %v60
    %v306 = vpop.f32.mrb[0].mxu0
    %v307 = vadd.f32 0.0, %v306
    %v308 = vpop.f32.mrb[0].mxu0
    %309 = vmatprep.mubr.f32.mxu0 0.0
    %310 = vmatmul.mubr.f32.gmra.mrb[0].mxu0 %v61
    %v311 = vpop.f32.mrb[0].mxu0
    %v312 = vadd.f32 0.0, %v311
    %v313 = vpop.f32.mrb[0].mxu0
    %314 = vmatprep.mubr.f32.mxu0 0.0
    %315 = vmatmul.mubr.f32.gmra.mrb[0].mxu0 %v62
    %v316 = vpop.f32.mrb[0].mxu0
    %v317 = vadd.f32 0.0, %v316
    %v318 = vpop.f32.mrb[0].mxu0
    %319 = vmatprep.mubr.f32.mxu0 0.0
    %320 = vmatmul.mubr.f32.gmra.mrb[0].mxu0 %v63
    %v321 = vpop.f32.mrb[0].mxu0
    %v322 = vadd.f32 0.0, %v321
    %v323 = vpop.f32.mrb[0].mxu0
    %324 = vmatprep.mubr.f32.mxu0 0.0
    %325 = vmatmul.mubr.f32.gmra.mrb[0].mxu0 %v64
    %v326 = vpop.f32.mrb[0].mxu0
    %v327 = vadd.f32 0.0, %v326
    %v328 = vpop.f32.mrb[0].mxu0
    %329 = vmatprep.mubr.f32.mxu0 0.0
    %330 = vmatmul.mubr.f32.gmra.mrb[0].mxu0 %v65
    %v331 = vpop.f32.mrb[0].mxu0
    %v332 = vadd.f32 0.0, %v331
    %v333 = vpop.f32.mrb[0].mxu0
    %334 = vmatprep.mubr.f32.mxu0 0.0
    %335 = vmatmul.mubr.f32.gmra.mrb[0].mxu0 %v66
    %v336 = vpop.f32.mrb[0].mxu0
    %v337 = vadd.f32 0.0, %v336
    %v338 = vpop.f32.mrb[0].mxu0
    %339 = vmatprep.mubr.f32.mxu0 0.0
    %340 = vmatmul.mubr.f32.gmra.mrb[0].mxu0 %v67
    %v341 = vpop.f32.mrb[0].mxu0
    %v342 = vadd.f32 0.0, %v341
    %v343 = vpop.f32.mrb[0].mxu0
    %344 = vmatprep.mubr.f32.mxu0 0.0
    %345 = vmatmul.mubr.f32.gmra.mrb[0].mxu0 %v68
    %v346 = vpop.f32.mrb[0].mxu0
    %v347 = vadd.f32 0.0, %v346
    %v348 = vpop.f32.mrb[0].mxu0
    %349 = vmatprep.mubr.f32.mxu0 0.0
    %350 = vmatmul.mubr.f32.gmra.mrb[0].mxu0 %v69
    %v351 = vpop.f32.mrb[0].mxu0
    %v352 = vadd.f32 0.0, %v351
    %v353 = vpop.f32.mrb[0].mxu0
    %354 = vmatprep.mubr.f32.mxu0 0.0
    %355 = vmatmul.mubr.f32.gmra.mrb[0].mxu0 %v70
    %v356 = vpop.f32.mrb[0].mxu0
    %v357 = vadd.f32 0.0, %v356
    %v358 = vpop.f32.mrb[0].mxu0
    %359 = vmatprep.mubr.f32.mxu0 0.0
    %360 = vmatmul.mubr.f32.gmra.mrb[0].mxu0 %v71
    %v361 = vpop.f32.mrb[0].mxu0
    %v362 = vadd.f32 0.0, %v361
    %v363 = vpop.f32.mrb[0].mxu0
    %364 = vmatprep.mubr.f32.mxu0 0.0
    %365 = vmatmul.mubr.f32.gmra.mrb[0].mxu0 %v72
    %v366 = vpop.f32.mrb[0].mxu0
    %v367 = vadd.f32 0.0, %v366
    %v368 = vpop.f32.mrb[0].mxu0
    %369 = vmatprep.mubr.f32.mxu0 0.0
    %370 = vmatmul.mubr.f32.gmra.mrb[0].mxu0 %v73
    %v371 = vpop.f32.mrb[0].mxu0
    %v372 = vadd.f32 0.0, %v371
    %v373 = vpop.f32.mrb[0].mxu0
    %374 = vmatprep.mubr.f32.mxu0 0.0
    %375 = vmatmul.mubr.f32.gmra.mrb[0].mxu0 %v74
    %v376 = vpop.f32.mrb[0].mxu0
    %v377 = vadd.f32 0.0, %v376
    %v378 = vpop.f32.mrb[0].mxu0
    %379 = vmatprep.mubr.f32.mxu0 0.0
    %380 = vmatmul.mubr.f32.gmra.mrb[0].mxu0 %v75
    %v381 = vpop.f32.mrb[0].mxu0
    %v382 = vadd.f32 0.0, %v381
    %v383 = vpop.f32.mrb[0].mxu0
    %384 = vmatprep.mubr.f32.mxu0 0.0
    %385 = vmatmul.mubr.f32.gmra.mrb[0].mxu0 %v76
    %v386 = vpop.f32.mrb[0].mxu0
    %v387 = vadd.f32 0.0, %v386
    %v388 = vpop.f32.mrb[0].mxu0
    %389 = vmatprep.mubr.f32.mxu0 0.0
    %390 = vmatmul.mubr.f32.gmra.mrb[0].mxu0 %v77
    %v391 = vpop.f32.mrb[0].mxu0
    %v392 = vadd.f32 0.0, %v391
    %v393 = vpop.f32.mrb[0].mxu0
    %394 = vmatprep.mubr.f32.mxu0 0.0
    %395 = vmatmul.mubr.f32.gmra.mrb[0].mxu0 %v78
    %v396 = vpop.f32.mrb[0].mxu0
    %v397 = vadd.f32 0.0, %v396
    %v398 = vpop.f32.mrb[0].mxu0
    %399 = vmatprep.mubr.f32.mxu0 0.0
    %400 = vmatmul.mubr.f32.gmra.mrb[0].mxu0 %v79
    %v401 = vpop.f32.mrb[0].mxu0
    %v402 = vadd.f32 0.0, %v401
    %v403 = vpop.f32.mrb[0].mxu0
    %404 = vmatprep.mubr.f32.mxu0 0.0
    %405 = vmatmul.mubr.f32.gmra.mrb[0].mxu0 %v80
    %v406 = vpop.f32.mrb[0].mxu0
    %v407 = vadd.f32 0.0, %v406
    %v408 = vpop.f32.mrb[0].mxu0
    %409 = vmatprep.mubr.f32.mxu0 0.0
    %410 = vmatmul.mubr.f32.gmra.mrb[0].mxu0 %v81
    %v411 = vpop.f32.mrb[0].mxu0
    %v412 = vadd.f32 0.0, %v411
    %v413 = vpop.f32.mrb[0].mxu0
    %414 = vmatprep.mubr.f32.mxu0 0.0
    %415 = vmatmul.mubr.f32.gmra.mrb[0].mxu0 %v82
    %v416 = vpop.f32.mrb[0].mxu0
    %v417 = vadd.f32 0.0, %v416
    %v418 = vpop.f32.mrb[0].mxu0
    %419 = vmatprep.mubr.f32.mxu0 0.0
    %420 = vmatmul.mubr.f32.gmra.mrb[0].mxu0 %v83
    %v421 = vpop.f32.mrb[0].mxu0
    %v422 = vadd.f32 0.0, %v421
    %v423 = vpop.f32.mrb[0].mxu0
    %424 = vmatprep.mubr.f32.mxu0 0.0
    %425 = vmatmul.mubr.f32.gmra.mrb[0].mxu0 %v84
    %v426 = vpop.f32.mrb[0].mxu0
    %v427 = vadd.f32 0.0, %v426
    %v428 = vpop.f32.mrb[0].mxu0
    %429 = vmatprep.mubr.f32.mxu0 0.0
    %430 = vmatmul.mubr.f32.gmra.mrb[0].mxu0 %v85
    %v431 = vpop.f32.mrb[0].mxu0
    %v432 = vadd.f32 0.0, %v431
    %v433 = vpop.f32.mrb[0].mxu0
    %434 = vmatprep.mubr.f32.mxu0 0.0
    %435 = vmatmul.mubr.f32.gmra.mrb[0].mxu0 %v86
    %v436 = vpop.f32.mrb[0].mxu0
    %v437 = vadd.f32 0.0, %v436
    %v438 = vpop.f32.mrb[0].mxu0
    %439 = vmatprep.mubr.f32.mxu0 0.0
    %440 = vmatmul.mubr.f32.gmra.mrb[0].mxu0 %v87
    %v441 = vpop.f32.mrb[0].mxu0
    %v442 = vadd.f32 0.0, %v441
    %v443 = vpop.f32.mrb[0].mxu0
    %444 = vmatprep.mubr.f32.mxu0 0.0
    %445 = vmatmul.mubr.f32.gmra.mrb[0].mxu0 %v88
    %v446 = vpop.f32.mrb[0].mxu0
    %v447 = vadd.f32 0.0, %v446
    %v448 = vpop.f32.mrb[0].mxu0
    %449 = vmatprep.mubr.f32.mxu0 0.0
    %450 = vmatmul.mubr.f32.gmra.mrb[0].mxu0 %v89
    %v451 = vpop.f32.mrb[0].mxu0
    %v452 = vadd.f32 0.0, %v451
    %v453 = vpop.f32.mrb[0].mxu0
    %454 = vmatprep.mubr.f32.mxu0 0.0
    %455 = vmatmul.mubr.f32.gmra.mrb[0].mxu0 %v90
    %v456 = vpop.f32.mrb[0].mxu0
    %v457 = vadd.f32 0.0, %v456
    %v458 = vpop.f32.mrb[0].mxu0
    %459 = vmatprep.mubr.f32.mxu0 0.0
    %460 = vmatmul.mubr.f32.gmra.mrb[0].mxu0 %v91
    %v461 = vpop.f32.mrb[0].mxu0
    %v462 = vadd.f32 0.0, %v461
    %v463 = vpop.f32.mrb[0].mxu0
    %464 = vmatprep.mubr.f32.mxu0 0.0
    %465 = vmatmul.mubr.f32.gmra.mrb[0].mxu0 %v92
    %v466 = vpop.f32.mrb[0].mxu0
    %v467 = vadd.f32 0.0, %v466
    %v468 = vpop.f32.mrb[0].mxu0
    %469 = vmatprep.mubr.f32.mxu0 0.0
    %470 = vmatmul.mubr.f32.gmra.mrb[0].mxu0 %v93
    %v471 = vpop.f32.mrb[0].mxu0
    %v472 = vadd.f32 0.0, %v471
    %v473 = vpop.f32.mrb[0].mxu0
    %474 = vmatprep.mubr.f32.mxu0 0.0
    %475 = vmatmul.mubr.f32.gmra.mrb[0].mxu0 %v94
    %v476 = vpop.f32.mrb[0].mxu0
    %v477 = vadd.f32 0.0, %v476
    %v478 = vpop.f32.mrb[0].mxu0
    %479 = vmatprep.mubr.f32.mxu0 0.0
    %480 = vmatmul.mubr.f32.gmra.mrb[0].mxu0 %v95
    %v481 = vpop.f32.mrb[0].mxu0
    %v482 = vadd.f32 0.0, %v481
    %v483 = vpop.f32.mrb[0].mxu0
    %484 = vmatprep.mubr.f32.mxu0 0.0
    %485 = vmatmul.mubr.f32.gmra.mrb[0].mxu0 %v96
    %v486 = vpop.f32.mrb[0].mxu0
    %v487 = vadd.f32 0.0, %v486
    %v488 = vpop.f32.mrb[0].mxu0
    %489 = vmatprep.mubr.f32.mxu0 0.0
    %490 = vmatmul.mubr.f32.gmra.mrb[0].mxu0 %v97
    %v491 = vpop.f32.mrb[0].mxu0
    %v492 = vadd.f32 0.0, %v491
    %v493 = vpop.f32.mrb[0].mxu0
    %494 = vmatprep.mubr.f32.mxu0 0.0
    %495 = vmatmul.mubr.f32.gmra.mrb[0].mxu0 %v98
    %v496 = vpop.f32.mrb[0].mxu0
    %v497 = vadd.f32 0.0, %v496
    %v498 = vpop.f32.mrb[0].mxu0
    %499 = vdwg.mxu0
    %v500 = vmax.f32 %v182, 0.0
    %v501 = vmax.f32 %v187, 0.0
    %v502 = vmax.f32 %v192, 0.0
    %v503 = vmax.f32 %v197, 0.0
    %v504 = vmax.f32 %v202, 0.0
    %v505 = vmax.f32 %v207, 0.0
    %v506 = vmax.f32 %v212, 0.0
    %v507 = vmax.f32 %v217, 0.0
    %v508 = vmax.f32 %v222, 0.0
    %v509 = vmax.f32 %v227, 0.0
    %v510 = vmax.f32 %v232, 0.0
    %v511 = vmax.f32 %v237, 0.0
    %v512 = vmax.f32 %v242, 0.0
    %v513 = vmax.f32 %v247, 0.0
    %v514 = vmax.f32 %v252, 0.0
    %v515 = vmax.f32 %v257, 0.0
    %v516 = vmax.f32 %v262, 0.0
    %v517 = vmax.f32 %v267, 0.0
    %v518 = vmax.f32 %v272, 0.0
    %v519 = vmax.f32 %v277, 0.0
    %v520 = vmax.f32 %v282, 0.0
    %v521 = vmax.f32 %v287, 0.0
    %v522 = vmax.f32 %v292, 0.0
    %v523 = vmax.f32 %v297, 0.0
    %v524 = vmax.f32 %v302, 0.0
    %v525 = vmax.f32 %v307, 0.0
    %v526 = vmax.f32 %v312, 0.0
    %v527 = vmax.f32 %v317, 0.0
    %v528 = vmax.f32 %v322, 0.0
    %v529 = vmax.f32 %v327, 0.0
    %v530 = vmax.f32 %v332, 0.0
    %v531 = vmax.f32 %v337, 0.0
    %v532 = vmax.f32 %v342, 0.0
    %v533 = vmax.f32 %v347, 0.0
    %v534 = vmax.f32 %v352, 0.0
    %v535 = vmax.f32 %v357, 0.0
    %v536 = vmax.f32 %v362, 0.0
    %v537 = vmax.f32 %v367, 0.0
    %v538 = vmax.f32 %v372, 0.0
    %v539 = vmax.f32 %v377, 0.0
    %v540 = vmax.f32 %v382, 0.0
    %v541 = vmax.f32 %v387, 0.0
    %v542 = vmax.f32 %v392, 0.0
    %v543 = vmax.f32 %v397, 0.0
    %v544 = vmax.f32 %v402, 0.0
    %v545 = vmax.f32 %v407, 0.0
    %v546 = vmax.f32 %v412, 0.0
    %v547 = vmax.f32 %v417, 0.0
    %v548 = vmax.f32 %v422, 0.0
    %v549 = vmax.f32 %v427, 0.0
    %v550 = vmax.f32 %v432, 0.0
    %v551 = vmax.f32 %v437, 0.0
    %v552 = vmax.f32 %v442, 0.0
    %v553 = vmax.f32 %v447, 0.0
    %v554 = vmax.f32 %v452, 0.0
    %v555 = vmax.f32 %v457, 0.0
    %v556 = vmax.f32 %v462, 0.0
    %v557 = vmax.f32 %v467, 0.0
    %v558 = vmax.f32 %v472, 0.0
    %v559 = vmax.f32 %v477, 0.0
    %v560 = vmax.f32 %v482, 0.0
    %v561 = vmax.f32 %v487, 0.0
    %v562 = vmax.f32 %v492, 0.0
    %v563 = vmax.f32 %v497, 0.0
    %v564 = vld [vmem:[%s2] sm:$0xff]
    %v566 = vcombine.high %v564, %v564
    %v568 = vunpack.c.l.s4 1983009808
    %v569 = vunpack.c.0.s8 %v568
    %v570 = vlaneseq
    %v571 = vshrl.u32 %v570, 7
    %v572 = vsub.s32 %v569, %v571
    %v573 = vrot.slane %v564, %v572
    %v575 = vunpack.c.l.s4 1983009808
    %v576 = vunpack.c.0.s8 %v575
    %v577 = vlaneseq
    %v578 = vshrl.u32 %v577, 7
    %v579 = vsub.s32 %v576, %v578
    %v580 = vrot.slane %v566, %v579
    %v581 = vcombine.high %v573, %v573
    %v582 = vcombine.high %v580, %v580
    %587 = vmatprep.subr.mxu0 0.0
    %588 = vmatpush1.msra.mxu0 %v500
    %589 = vmatprep.subr.mxu0 0.0
    %590 = vmatpush1.msra.mxu0 %v501
    %591 = vmatprep.subr.mxu0 0.0
    %592 = vmatpush1.msra.mxu0 %v502
    %593 = vmatprep.subr.mxu0 0.0
    %594 = vmatpush1.msra.mxu0 %v503
    %595 = vmatprep.subr.mxu0 0.0
    %596 = vmatpush1.msra.mxu0 %v504
    %597 = vmatprep.subr.mxu0 0.0
    %598 = vmatpush1.msra.mxu0 %v505
    %599 = vmatprep.subr.mxu0 0.0
    %600 = vmatpush1.msra.mxu0 %v506
    %601 = vmatprep.subr.mxu0 0.0
    %602 = vmatpush1.msra.mxu0 %v507
    %603 = vmatprep.subr.mxu0 0.0
    %604 = vmatpush1.msra.mxu0 %v508
    %605 = vmatprep.subr.mxu0 0.0
    %606 = vmatpush1.msra.mxu0 %v509
    %607 = vmatprep.subr.mxu0 0.0
    %608 = vmatpush1.msra.mxu0 %v510
    %609 = vmatprep.subr.mxu0 0.0
    %610 = vmatpush1.msra.mxu0 %v511
    %611 = vmatprep.subr.mxu0 0.0
    %612 = vmatpush1.msra.mxu0 %v512
    %613 = vmatprep.subr.mxu0 0.0
    %614 = vmatpush1.msra.mxu0 %v513
    %615 = vmatprep.subr.mxu0 0.0
    %616 = vmatpush1.msra.mxu0 %v514
    %617 = vmatprep.subr.mxu0 0.0
    %618 = vmatpush1.msra.mxu0 %v515
    %619 = vmatprep.subr.mxu0 0.0
    %620 = vmatpush1.msra.mxu0 %v516
    %621 = vmatprep.subr.mxu0 0.0
    %622 = vmatpush1.msra.mxu0 %v517
    %623 = vmatprep.subr.mxu0 0.0
    %624 = vmatpush1.msra.mxu0 %v518
    %625 = vmatprep.subr.mxu0 0.0
    %626 = vmatpush1.msra.mxu0 %v519
    %627 = vmatprep.subr.mxu0 0.0
    %628 = vmatpush1.msra.mxu0 %v520
    %629 = vmatprep.subr.mxu0 0.0
    %630 = vmatpush1.msra.mxu0 %v521
    %631 = vmatprep.subr.mxu0 0.0
    %632 = vmatpush1.msra.mxu0 %v522
    %633 = vmatprep.subr.mxu0 0.0
    %634 = vmatpush1.msra.mxu0 %v523
    %635 = vmatprep.subr.mxu0 0.0
    %636 = vmatpush1.msra.mxu0 %v524
    %637 = vmatprep.subr.mxu0 0.0
    %638 = vmatpush1.msra.mxu0 %v525
    %639 = vmatprep.subr.mxu0 0.0
    %640 = vmatpush1.msra.mxu0 %v526
    %641 = vmatprep.subr.mxu0 0.0
    %642 = vmatpush1.msra.mxu0 %v527
    %643 = vmatprep.subr.mxu0 0.0
    %644 = vmatpush1.msra.mxu0 %v528
    %645 = vmatprep.subr.mxu0 0.0
    %646 = vmatpush1.msra.mxu0 %v529
    %647 = vmatprep.subr.mxu0 0.0
    %648 = vmatpush1.msra.mxu0 %v530
    %649 = vmatprep.subr.mxu0 0.0
    %650 = vmatpush1.msra.mxu0 %v531
    %651 = vmatprep.mubr.f32.mxu0 %v581
    %652 = vmatmul.mubr.f32.gmra.mrb[0].mxu0 %v573
    %v653 = vpop.f32.mrb[0].mxu0
    %v654 = vadd.f32 0.0, %v653
    %v655 = vpop.f32.mrb[0].mxu0
    %656 = vdwg.mxu0
    %657 = vmatprep.subr.mxu0 0.0
    %658 = vmatpush1.msra.mxu0 %v532
    %659 = vmatprep.subr.mxu0 0.0
    %660 = vmatpush1.msra.mxu0 %v533
    %661 = vmatprep.subr.mxu0 0.0
    %662 = vmatpush1.msra.mxu0 %v534
    %663 = vmatprep.subr.mxu0 0.0
    %664 = vmatpush1.msra.mxu0 %v535
    %665 = vmatprep.subr.mxu0 0.0
    %666 = vmatpush1.msra.mxu0 %v536
    %667 = vmatprep.subr.mxu0 0.0
    %668 = vmatpush1.msra.mxu0 %v537
    %669 = vmatprep.subr.mxu0 0.0
    %670 = vmatpush1.msra.mxu0 %v538
    %671 = vmatprep.subr.mxu0 0.0
    %672 = vmatpush1.msra.mxu0 %v539
    %673 = vmatprep.subr.mxu0 0.0
    %674 = vmatpush1.msra.mxu0 %v540
    %675 = vmatprep.subr.mxu0 0.0
    %676 = vmatpush1.msra.mxu0 %v541
    %677 = vmatprep.subr.mxu0 0.0
    %678 = vmatpush1.msra.mxu0 %v542
    %679 = vmatprep.subr.mxu0 0.0
    %680 = vmatpush1.msra.mxu0 %v543
    %681 = vmatprep.subr.mxu0 0.0
    %682 = vmatpush1.msra.mxu0 %v544
    %683 = vmatprep.subr.mxu0 0.0
    %684 = vmatpush1.msra.mxu0 %v545
    %685 = vmatprep.subr.mxu0 0.0
    %686 = vmatpush1.msra.mxu0 %v546
    %687 = vmatprep.subr.mxu0 0.0
    %688 = vmatpush1.msra.mxu0 %v547
    %689 = vmatprep.subr.mxu0 0.0
    %690 = vmatpush1.msra.mxu0 %v548
    %691 = vmatprep.subr.mxu0 0.0
    %692 = vmatpush1.msra.mxu0 %v549
    %693 = vmatprep.subr.mxu0 0.0
    %694 = vmatpush1.msra.mxu0 %v550
    %695 = vmatprep.subr.mxu0 0.0
    %696 = vmatpush1.msra.mxu0 %v551
    %697 = vmatprep.subr.mxu0 0.0
    %698 = vmatpush1.msra.mxu0 %v552
    %699 = vmatprep.subr.mxu0 0.0
    %700 = vmatpush1.msra.mxu0 %v553
    %701 = vmatprep.subr.mxu0 0.0
    %702 = vmatpush1.msra.mxu0 %v554
    %703 = vmatprep.subr.mxu0 0.0
    %704 = vmatpush1.msra.mxu0 %v555
    %705 = vmatprep.subr.mxu0 0.0
    %706 = vmatpush1.msra.mxu0 %v556
    %707 = vmatprep.subr.mxu0 0.0
    %708 = vmatpush1.msra.mxu0 %v557
    %709 = vmatprep.subr.mxu0 0.0
    %710 = vmatpush1.msra.mxu0 %v558
    %711 = vmatprep.subr.mxu0 0.0
    %712 = vmatpush1.msra.mxu0 %v559
    %713 = vmatprep.subr.mxu0 0.0
    %714 = vmatpush1.msra.mxu0 %v560
    %715 = vmatprep.subr.mxu0 0.0
    %716 = vmatpush1.msra.mxu0 %v561
    %717 = vmatprep.subr.mxu0 0.0
    %718 = vmatpush1.msra.mxu0 %v562
    %719 = vmatprep.subr.mxu0 0.0
    %720 = vmatpush1.msra.mxu0 %v563
    %721 = vmatprep.mubr.f32.mxu0 %v582
    %722 = vmatmul.mubr.f32.gmra.mrb[0].mxu0 %v580
    %v723 = vpop.f32.mrb[0].mxu0
    %v724 = vadd.f32 %v654, %v723
    %v725 = vpop.f32.mrb[0].mxu0
    %726 = vdwg.mxu0
    %v727 = vld [vmem:[%s3] sm:$0xff]
    %v728 = vld [vmem:[%s4] sm:$0x1]
    %v730 = vlaneseq
    %v731 = vshrl.u32 %v730, 7
    %v732 = vsub.s32 0, %v731
    %v733 = vrot.slane %v728, %v732
    %vm735 = vcmask 64512
    %v737 = vsel %vm735, %v724, 0
    %739 = vmatprep.subr.mxu0 0.0
    %740 = vmatpush1.msra.mxu0 %v727
    %741 = vmatprep.subr.mxu0 0.0
    %742 = vmatpush1.msra.mxu0 0.0
    %743 = vmatprep.subr.mxu0 0.0
    %744 = vmatpush1.msra.mxu0 0.0
    %745 = vmatprep.subr.mxu0 0.0
    %746 = vmatpush1.msra.mxu0 0.0
    %747 = vmatprep.subr.mxu0 0.0
    %748 = vmatpush1.msra.mxu0 0.0
    %749 = vmatprep.subr.mxu0 0.0
    %750 = vmatpush1.msra.mxu0 0.0
    %751 = vmatprep.subr.mxu0 0.0
    %752 = vmatpush1.msra.mxu0 0.0
    %753 = vmatprep.subr.mxu0 0.0
    %754 = vmatpush1.msra.mxu0 0.0
    %755 = vmatprep.subr.mxu0 0.0
    %756 = vmatpush1.msra.mxu0 0.0
    %757 = vmatprep.subr.mxu0 0.0
    %758 = vmatpush1.msra.mxu0 0.0
    %759 = vmatprep.subr.mxu0 0.0
    %760 = vmatpush1.msra.mxu0 0.0
    %761 = vmatprep.subr.mxu0 0.0
    %762 = vmatpush1.msra.mxu0 0.0
    %763 = vmatprep.subr.mxu0 0.0
    %764 = vmatpush1.msra.mxu0 0.0
    %765 = vmatprep.subr.mxu0 0.0
    %766 = vmatpush1.msra.mxu0 0.0
    %767 = vmatprep.subr.mxu0 0.0
    %768 = vmatpush1.msra.mxu0 0.0
    %769 = vmatprep.subr.mxu0 0.0
    %770 = vmatpush1.msra.mxu0 0.0
    %771 = vmatprep.subr.mxu0 0.0
    %772 = vmatpush1.msra.mxu0 0.0
    %773 = vmatprep.subr.mxu0 0.0
    %774 = vmatpush1.msra.mxu0 0.0
    %775 = vmatprep.subr.mxu0 0.0
    %776 = vmatpush1.msra.mxu0 0.0
    %777 = vmatprep.subr.mxu0 0.0
    %778 = vmatpush1.msra.mxu0 0.0
    %779 = vmatprep.subr.mxu0 0.0
    %780 = vmatpush1.msra.mxu0 0.0
    %781 = vmatprep.subr.mxu0 0.0
    %782 = vmatpush1.msra.mxu0 0.0
    %783 = vmatprep.subr.mxu0 0.0
    %784 = vmatpush1.msra.mxu0 0.0
    %785 = vmatprep.subr.mxu0 0.0
    %786 = vmatpush1.msra.mxu0 0.0
    %787 = vmatprep.subr.mxu0 0.0
    %788 = vmatpush1.msra.mxu0 0.0
    %789 = vmatprep.subr.mxu0 0.0
    %790 = vmatpush1.msra.mxu0 0.0
    %791 = vmatprep.subr.mxu0 0.0
    %792 = vmatpush1.msra.mxu0 0.0
    %793 = vmatprep.subr.mxu0 0.0
    %794 = vmatpush1.msra.mxu0 0.0
    %795 = vmatprep.subr.mxu0 0.0
    %796 = vmatpush1.msra.mxu0 0.0
    %797 = vmatprep.subr.mxu0 0.0
    %798 = vmatpush1.msra.mxu0 0.0
    %799 = vmatprep.subr.mxu0 0.0
    %800 = vmatpush1.msra.mxu0 0.0
    %801 = vmatprep.subr.mxu0 0.0
    %802 = vmatpush1.msra.mxu0 0.0
    %803 = vmatprep.mubr.f32.mxu0 0.0
    %804 = vmatmul.mubr.f32.gmra.mrb[0].mxu0 %v737
    %v805 = vpop.f32.mrb[0].mxu0
    %v806 = vadd.f32 %v733, %v805
    %v807 = vpop.f32.mrb[0].mxu0
    %808 = vdwg.mxu0
    %vm809 = vcmask 123904
    %810 = vst.msk [vmem:[#allocation5] sm:$0x3] %vm809, %v806
    // Predicated region
    $region26: #{tpu_custom_call.1} parent=1 // pred_check
      _
    $region27: #{tpu_custom_call.1} parent=1 // pred_check_branch
      %812 = sbr.rel (0) target = $region29
    $region28: #{tpu_custom_call.1} parent=1 // pred_region
      %s814 = ssub.s32 32, 32
      %815 = vsyncadd [#allocation4], %s814
      %s817 = sshll.u32 [#allocation5], 4
      %s818 = int_to_ptr.vmem [resolvable:$true] %s817
      %820 = dma.vmem_to_hbm [thread:$0]  %s818, 32, %s5, [#allocation4]
    $region29: #{tpu_custom_call.1} parent=1 // pred_fallthru
      _
    // Predicated region
    $region30: #{tpu_custom_call.1} parent=1 // pred_check
      _
    $region31: #{tpu_custom_call.1} parent=1 // pred_check_branch
      %822 = sbr.rel (0) target = $region33
    $region32: #{tpu_custom_call.1} parent=1 // pred_region
      %823 = dma.done [#allocation4], 32
    $region33: #{tpu_custom_call.1} parent=1 // pred_fallthru
      _
    %824 = vsyncpa [#allocation3], 1
    %825 = vsyncpa [#allocation4], 1

</llo_original>
